<compile_context>
chip_gen: v5e
topology: v5e:2x2
jax: 0.10.0
libtpu: 0.0.40
codegen_flags: <defaults>
</compile_context>

<pallas_src>
import math
import numpy as np

import jax
import jax.numpy as jnp
from jax.experimental import pallas as pl
from jax.experimental.pallas import tpu as pltpu


# ----------------------------------------------------------------------------
# Fused kernel: gconv1 -> gconv2 -> residual add, everything stays in VMEM.
# ----------------------------------------------------------------------------
def _res_gconv_kernel(x_ref, diag_ref, adj_ref, a1_ref, b1_ref, s1_ref,
                      a2_ref, b2_ref, s2_ref, o_ref):
    tb, J, cin = x_ref.shape
    hid = a1_ref.shape[1]
    cout = a2_ref.shape[1]

    x3 = x_ref[...]                                    # (tb, J, Cin) -- also residual
    diag = diag_ref[...][None, :, :]                   # (1, J, 1) = diag(adj)
    adj_b = jnp.broadcast_to(adj_ref[...], (tb, J, J))  # (tb, J, J) off-diag adjacency

    # ---- layer 1: SemGraphConv (BN folded) + ReLU ----
    dx = (diag * x3).reshape(tb * J, cin)
    ax = jnp.einsum('bjk,bkc->bjc', adj_b, x3,
                    preferred_element_type=jnp.float32).reshape(tb * J, cin)
    y = (jnp.dot(dx, a1_ref[...], preferred_element_type=jnp.float32)
         + jnp.dot(ax, b1_ref[...], preferred_element_type=jnp.float32)
         + s1_ref[...])
    y = jnp.maximum(y, 0.0).reshape(tb, J, hid)

    # ---- layer 2: SemGraphConv (BN folded) + ReLU ----
    dy = (diag * y).reshape(tb * J, hid)
    ay = jnp.einsum('bjk,bkc->bjc', adj_b, y,
                    preferred_element_type=jnp.float32).reshape(tb * J, hid)
    z = (jnp.dot(dy, a2_ref[...], preferred_element_type=jnp.float32)
         + jnp.dot(ay, b2_ref[...], preferred_element_type=jnp.float32)
         + s2_ref[...])
    z = jnp.maximum(z, 0.0).reshape(tb, J, cout)

    # ---- residual add ----
    o_ref[...] = (x3 + z).astype(o_ref.dtype)


# ----------------------------------------------------------------------------
# Helpers
# ----------------------------------------------------------------------------
def _const_spec(shape):
    nd = len(shape)
    return pl.BlockSpec(shape, lambda b, _nd=nd: (0,) * _nd)


def _choose_tile_batch(B, J, *, max_rows_per_step=1024, prefer_two_steps=True):
    """As many batch rows per grid step as possible (amortize ~0.35us/step), but
    prefer an even 2-step grid when B allows so the 'parallel' batch axis feeds
    both v7x TensorCores."""
    cap = max(1, max_rows_per_step // max(J, 1))
    tb = min(B, cap)
    while B % tb != 0:
        tb -= 1
    if prefer_two_steps and (B % 2 == 0) and (B // tb) < 2:
        tb = B // 2
    return max(tb, 1)


def build_adj_softmax(adj_np):
    """adj[m] = e (init 1.0), elsewhere -9e15, softmax over dim=1 (host-side numpy)."""
    adj_np = np.asarray(adj_np, dtype=np.float32)
    m = adj_np > 0
    masked = np.full(adj_np.shape, -9.0e15, dtype=np.float32)
    masked[m] = 1.0
    mx = masked.max(axis=1, keepdims=True)
    e = np.exp(masked - mx)
    return (e / e.sum(axis=1, keepdims=True)).astype(np.float32)


# ----------------------------------------------------------------------------
# Factory: all constant prep runs ONCE here; the returned fn is a bare jitted
# pallas_call (no per-call prep HLOs).
# ----------------------------------------------------------------------------
def make_res_graph_conv(adj, W1, b1, bn1_scale, bn1_shift,
                        W2, b2, bn2_scale, bn2_shift,
                        *, max_rows_per_step=1024, prefer_two_steps=True):
    adj = np.asarray(adj, np.float32)
    W1 = np.asarray(W1, np.float32); b1 = np.asarray(b1, np.float32)
    W2 = np.asarray(W2, np.float32); b2 = np.asarray(b2, np.float32)
    sc1 = np.asarray(bn1_scale, np.float32); sh1 = np.asarray(bn1_shift, np.float32)
    sc2 = np.asarray(bn2_scale, np.float32); sh2 = np.asarray(bn2_shift, np.float32)

    J = adj.shape[0]
    cin, hid = W1.shape[1], W1.shape[2]
    cout = W2.shape[2]
    assert cin == cout, "residual add requires input_dim == output_dim"
    assert W2.shape[1] == hid

    # Softmax-normalized adjacency, split into diagonal column + off-diagonal matrix.
    adj_soft = build_adj_softmax(adj)
    diag_col = jnp.asarray(np.ascontiguousarray(np.diagonal(adj_soft)).reshape(J, 1))
    adj_off = jnp.asarray(adj_soft * (1.0 - np.eye(J, dtype=np.float32)))

    # Fold eval-mode BatchNorm into the weights / shift (per-output-channel scale
    # commutes through the adjacency aggregation).
    a1 = jnp.asarray(W1[0] * sc1[None, :])               # (Cin, hid)
    b1w = jnp.asarray(W1[1] * sc1[None, :])              # (Cin, hid)
    s1 = jnp.asarray((b1 * sc1 + sh1).reshape(1, hid))
    a2 = jnp.asarray(W2[0] * sc2[None, :])                # (hid, Cout)
    b2w = jnp.asarray(W2[1] * sc2[None, :])               # (hid, Cout)
    s2 = jnp.asarray((b2 * sc2 + sh2).reshape(1, cout))

    def forward(x):
        B, Jx, Cx = x.shape
        assert Jx == J and Cx == cin
        tb = _choose_tile_batch(B, J, max_rows_per_step=max_rows_per_step,
                                prefer_two_steps=prefer_two_steps)
        grid = (B // tb,)
        return pl.pallas_call(
            _res_gconv_kernel,
            out_shape=jax.ShapeDtypeStruct((B, J, cout), x.dtype),
            grid_spec=pltpu.PrefetchScalarGridSpec(
                num_scalar_prefetch=0,
                grid=grid,
                in_specs=[
                    pl.BlockSpec((tb, J, cin), lambda b: (b, 0, 0)),  # x / residual
                    _const_spec((J, 1)),        # diag(adj)
                    _const_spec((J, J)),        # off-diagonal adjacency
                    _const_spec((cin, hid)),    # layer-1 W0 (BN folded)
                    _const_spec((cin, hid)),    # layer-1 W1 (BN folded)
                    _const_spec((1, hid)),      # layer-1 shift
                    _const_spec((hid, cout)),   # layer-2 W0 (BN folded)
                    _const_spec((hid, cout)),   # layer-2 W1 (BN folded)
                    _const_spec((1, cout)),     # layer-2 shift
                ],
                out_specs=pl.BlockSpec((tb, J, cout), lambda b: (b, 0, 0)),
            ),
            compiler_params=pltpu.CompilerParams(
                dimension_semantics=("parallel",)),
        )(x, diag_col, adj_off, a1, b1w, s1, a2, b2w, s2)

    return jax.jit(forward)


# ----------------------------------------------------------------------------
# Parameter construction (deterministic, mirrors module __init__ / eval BN)
# ----------------------------------------------------------------------------
def init_sem_graph_conv(key, in_features, out_features):
    """W (2, Cin, Cout) xavier_uniform(gain=1.414), bias uniform(-stdv, stdv)."""
    kW, kb = jax.random.split(key)
    fan_in = in_features * out_features
    fan_out = 2 * out_features
    bound = 1.414 * math.sqrt(6.0 / (fan_in + fan_out))
    W = jax.random.uniform(kW, (2, in_features, out_features),
                           jnp.float32, -bound, bound)
    stdv = 1.0 / math.sqrt(out_features)
    bias = jax.random.uniform(kb, (out_features,), jnp.float32, -stdv, stdv)
    return W, bias


def make_bn_inference_params(key, num_features, eps=1e-5):
    """Deterministic non-trivial eval-mode BatchNorm1d -> (scale, shift)."""
    kg, kb, km, kv = jax.random.split(key, 4)
    gamma = 1.0 + 0.1 * jax.random.normal(kg, (num_features,), jnp.float32)
    beta = 0.1 * jax.random.normal(kb, (num_features,), jnp.float32)
    mean = 0.1 * jax.random.normal(km, (num_features,), jnp.float32)
    var = jax.random.uniform(kv, (num_features,), jnp.float32, 0.5, 1.5)
    scale = gamma / jnp.sqrt(var + eps)
    shift = beta - mean * scale
    return scale, shift


# ----------------------------------------------------------------------------
# Pure-JAX reference (follows the PyTorch formulation)
# ----------------------------------------------------------------------------
def _ref_graph_conv(x, adj_soft, W0, W1, bias, scale, shift):
    J = adj_soft.shape[0]
    eye = jnp.eye(J, dtype=x.dtype)
    h0 = x @ W0
    h1 = x @ W1
    out = (adj_soft * eye) @ h0 + (adj_soft * (1.0 - eye)) @ h1 + bias
    out = out * scale + shift
    return jnp.maximum(out, 0.0)


def ref_res_graph_conv(x, adj_soft, W1, b1, sc1, sh1, W2, b2, sc2, sh2):
    h = _ref_graph_conv(x, adj_soft, W1[0], W1[1], b1, sc1, sh1)
    out = _ref_graph_conv(h, adj_soft, W2[0], W2[1], b2, sc2, sh2)
    return x + out


# ----------------------------------------------------------------------------
# Main
# ----------------------------------------------------------------------------
if __name__ == "__main__":
    B, J = 8, 16           # batch, num joints
    input_dim = 32         # == output_dim (required for the residual add)
    output_dim = 32
    hid_dim = 64

    key = jax.random.PRNGKey(0)
    kx, k1, k2, kb1, kb2 = jax.random.split(key, 5)

    # Chain-graph adjacency with self loops (J joints).
    adj_np = np.eye(J, dtype=np.float32)
    for i in range(J - 1):
        adj_np[i, i + 1] = 1.0
        adj_np[i + 1, i] = 1.0

    # gconv1: input_dim -> hid_dim ; gconv2: hid_dim -> output_dim
    W_1, b_1 = init_sem_graph_conv(k1, input_dim, hid_dim)
    W_2, b_2 = init_sem_graph_conv(k2, hid_dim, output_dim)
    sc1, sh1 = make_bn_inference_params(kb1, hid_dim)
    sc2, sh2 = make_bn_inference_params(kb2, output_dim)

    x = jax.random.normal(kx, (B, J, input_dim), jnp.float32)

    # --- Build once (host-side constant prep), then call the fused Pallas kernel ---
    forward = make_res_graph_conv(adj_np, W_1, b_1, sc1, sh1,
                                  W_2, b_2, sc2, sh2)
    out = jax.block_until_ready(forward(x))

    # --- Reference check ---
    adj_soft = jnp.asarray(build_adj_softmax(adj_np))
    out_ref = ref_res_graph_conv(x, adj_soft, W_1, b_1, sc1, sh1,
                                 W_2, b_2, sc2, sh2)
    np.testing.assert_allclose(np.asarray(out), np.asarray(out_ref),
                               rtol=1e-4, atol=1e-4)

    print("KERNEL_OK")
</pallas_src>

<mosaic_0001>
module attributes {stable_mosaic.version = 11 : i64} {
  func.func @_res_gconv_kernel(%arg0: i32, %arg1: memref<4x16x32xf32, #tpu.memory_space<vmem>>, %arg2: memref<16x1xf32, #tpu.memory_space<vmem>>, %arg3: memref<16x16xf32, #tpu.memory_space<vmem>>, %arg4: memref<32x64xf32, #tpu.memory_space<vmem>>, %arg5: memref<32x64xf32, #tpu.memory_space<vmem>>, %arg6: memref<1x64xf32, #tpu.memory_space<vmem>>, %arg7: memref<64x32xf32, #tpu.memory_space<vmem>>, %arg8: memref<64x32xf32, #tpu.memory_space<vmem>>, %arg9: memref<1x32xf32, #tpu.memory_space<vmem>>, %arg10: memref<4x16x32xf32, #tpu.memory_space<vmem>>) attributes {dimension_semantics = [#tpu.dimension_semantics<parallel>], iteration_bounds = array<i64: 2>, scalar_prefetch = 0 : i64, scratch_operands = 0 : i64, tpu.core_type = #tpu.core_type<tc>, window_params = [{transform_indices = @transform_0, window_bounds = array<i64: 4, 16, 32>}, {pipeline_mode = #tpu.pipeline_mode<synchronous>, transform_indices = @transform_1, window_bounds = array<i64: 16, 1>}, {pipeline_mode = #tpu.pipeline_mode<synchronous>, transform_indices = @transform_2, window_bounds = array<i64: 16, 16>}, {pipeline_mode = #tpu.pipeline_mode<synchronous>, transform_indices = @transform_3, window_bounds = array<i64: 32, 64>}, {pipeline_mode = #tpu.pipeline_mode<synchronous>, transform_indices = @transform_4, window_bounds = array<i64: 32, 64>}, {pipeline_mode = #tpu.pipeline_mode<synchronous>, transform_indices = @transform_5, window_bounds = array<i64: 1, 64>}, {pipeline_mode = #tpu.pipeline_mode<synchronous>, transform_indices = @transform_6, window_bounds = array<i64: 64, 32>}, {pipeline_mode = #tpu.pipeline_mode<synchronous>, transform_indices = @transform_7, window_bounds = array<i64: 64, 32>}, {pipeline_mode = #tpu.pipeline_mode<synchronous>, transform_indices = @transform_8, window_bounds = array<i64: 1, 32>}, {transform_indices = @transform_9, window_bounds = array<i64: 4, 16, 32>}]} {
    %c0 = arith.constant 0 : index
    %c0_0 = arith.constant 0 : index
    %c0_1 = arith.constant 0 : index
    %0 = vector.load %arg1[%c0, %c0_0, %c0_1] : memref<4x16x32xf32, #tpu.memory_space<vmem>>, vector<4x16x32xf32>
    %c0_2 = arith.constant 0 : index
    %c0_3 = arith.constant 0 : index
    %1 = vector.load %arg2[%c0_2, %c0_3] : memref<16x1xf32, #tpu.memory_space<vmem>>, vector<16x1xf32>
    %2 = vector.shape_cast %1 : vector<16x1xf32> to vector<1x16x1xf32>
    %c0_4 = arith.constant 0 : index
    %c0_5 = arith.constant 0 : index
    %3 = vector.load %arg3[%c0_4, %c0_5] : memref<16x16xf32, #tpu.memory_space<vmem>>, vector<16x16xf32>
    %4 = vector.shape_cast %3 : vector<16x16xf32> to vector<1x16x16xf32>
    %5 = vector.broadcast %4 : vector<1x16x16xf32> to vector<4x16x16xf32>
    %6 = vector.broadcast %2 : vector<1x16x1xf32> to vector<4x16x32xf32>
    %7 = arith.mulf %6, %0 : vector<4x16x32xf32>
    %8 = vector.shape_cast %7 : vector<4x16x32xf32> to vector<64x32xf32>
    "tpu.trace_start"() <{level = 10 : i32, message = "bjk,bkc->bjc"}> : () -> ()
    %cst = arith.constant dense<0.000000e+00> : vector<4x16x32xf32>
    %9 = tpu.matmul %5, %0, %cst {dimension_numbers = #tpu.dot_dimension_numbers<[2], [1], [1], [2], [0, 0, 0, 1, 1, 2], [0], [0]>} : vector<4x16x16xf32>, vector<4x16x32xf32>, vector<4x16x32xf32> -> vector<4x16x32xf32>
    "tpu.trace_stop"() : () -> ()
    %10 = vector.shape_cast %9 : vector<4x16x32xf32> to vector<64x32xf32>
    %c0_6 = arith.constant 0 : index
    %c0_7 = arith.constant 0 : index
    %11 = vector.load %arg4[%c0_6, %c0_7] : memref<32x64xf32, #tpu.memory_space<vmem>>, vector<32x64xf32>
    %cst_8 = arith.constant dense<0.000000e+00> : vector<64x64xf32>
    %12 = tpu.matmul %8, %11, %cst_8 {dimension_numbers = #tpu.dot_dimension_numbers<[1], [0], [0], [1], [0, 0, 1, 1], [], []>} : vector<64x32xf32>, vector<32x64xf32>, vector<64x64xf32> -> vector<64x64xf32>
    %c0_9 = arith.constant 0 : index
    %c0_10 = arith.constant 0 : index
    %13 = vector.load %arg5[%c0_9, %c0_10] : memref<32x64xf32, #tpu.memory_space<vmem>>, vector<32x64xf32>
    %cst_11 = arith.constant dense<0.000000e+00> : vector<64x64xf32>
    %14 = tpu.matmul %10, %13, %cst_11 {dimension_numbers = #tpu.dot_dimension_numbers<[1], [0], [0], [1], [0, 0, 1, 1], [], []>} : vector<64x32xf32>, vector<32x64xf32>, vector<64x64xf32> -> vector<64x64xf32>
    %15 = arith.addf %12, %14 : vector<64x64xf32>
    %c0_12 = arith.constant 0 : index
    %c0_13 = arith.constant 0 : index
    %16 = vector.load %arg6[%c0_12, %c0_13] : memref<1x64xf32, #tpu.memory_space<vmem>>, vector<1x64xf32>
    %17 = vector.broadcast %16 : vector<1x64xf32> to vector<64x64xf32>
    %18 = arith.addf %15, %17 : vector<64x64xf32>
    %cst_14 = arith.constant 0.000000e+00 : f32
    %19 = vector.broadcast %cst_14 : f32 to vector<64x64xf32>
    %20 = arith.maximumf %18, %19 : vector<64x64xf32>
    %21 = vector.shape_cast %20 : vector<64x64xf32> to vector<4x16x64xf32>
    %22 = vector.broadcast %2 : vector<1x16x1xf32> to vector<4x16x64xf32>
    %23 = arith.mulf %22, %21 : vector<4x16x64xf32>
    %24 = vector.shape_cast %23 : vector<4x16x64xf32> to vector<64x64xf32>
    "tpu.trace_start"() <{level = 10 : i32, message = "bjk,bkc->bjc"}> : () -> ()
    %cst_15 = arith.constant dense<0.000000e+00> : vector<4x16x64xf32>
    %25 = tpu.matmul %5, %21, %cst_15 {dimension_numbers = #tpu.dot_dimension_numbers<[2], [1], [1], [2], [0, 0, 0, 1, 1, 2], [0], [0]>} : vector<4x16x16xf32>, vector<4x16x64xf32>, vector<4x16x64xf32> -> vector<4x16x64xf32>
    "tpu.trace_stop"() : () -> ()
    %26 = vector.shape_cast %25 : vector<4x16x64xf32> to vector<64x64xf32>
    %c0_16 = arith.constant 0 : index
    %c0_17 = arith.constant 0 : index
    %27 = vector.load %arg7[%c0_16, %c0_17] : memref<64x32xf32, #tpu.memory_space<vmem>>, vector<64x32xf32>
    %cst_18 = arith.constant dense<0.000000e+00> : vector<64x32xf32>
    %28 = tpu.matmul %24, %27, %cst_18 {dimension_numbers = #tpu.dot_dimension_numbers<[1], [0], [0], [1], [0, 0, 1, 1], [], []>} : vector<64x64xf32>, vector<64x32xf32>, vector<64x32xf32> -> vector<64x32xf32>
    %c0_19 = arith.constant 0 : index
    %c0_20 = arith.constant 0 : index
    %29 = vector.load %arg8[%c0_19, %c0_20] : memref<64x32xf32, #tpu.memory_space<vmem>>, vector<64x32xf32>
    %cst_21 = arith.constant dense<0.000000e+00> : vector<64x32xf32>
    %30 = tpu.matmul %26, %29, %cst_21 {dimension_numbers = #tpu.dot_dimension_numbers<[1], [0], [0], [1], [0, 0, 1, 1], [], []>} : vector<64x64xf32>, vector<64x32xf32>, vector<64x32xf32> -> vector<64x32xf32>
    %31 = arith.addf %28, %30 : vector<64x32xf32>
    %c0_22 = arith.constant 0 : index
    %c0_23 = arith.constant 0 : index
    %32 = vector.load %arg9[%c0_22, %c0_23] : memref<1x32xf32, #tpu.memory_space<vmem>>, vector<1x32xf32>
    %33 = vector.broadcast %32 : vector<1x32xf32> to vector<64x32xf32>
    %34 = arith.addf %31, %33 : vector<64x32xf32>
    %cst_24 = arith.constant 0.000000e+00 : f32
    %35 = vector.broadcast %cst_24 : f32 to vector<64x32xf32>
    %36 = arith.maximumf %34, %35 : vector<64x32xf32>
    %37 = vector.shape_cast %36 : vector<64x32xf32> to vector<4x16x32xf32>
    %38 = arith.addf %0, %37 : vector<4x16x32xf32>
    %c0_25 = arith.constant 0 : index
    %c0_26 = arith.constant 0 : index
    %c0_27 = arith.constant 0 : index
    %39 = vector.load %arg10[%c0_25, %c0_26, %c0_27] : memref<4x16x32xf32, #tpu.memory_space<vmem>>, vector<4x16x32xf32>
    tpu.vector_store %arg10[%c0_25, %c0_26, %c0_27], %38 {strides = array<i32>} : memref<4x16x32xf32, #tpu.memory_space<vmem>>, vector<4x16x32xf32>,
    return
  }
  func.func @transform_0(%arg0: i32) -> (i32, i32, i32) {
    %c0_i32 = arith.constant 0 : i32
    %c0_i32_0 = arith.constant 0 : i32
    %c0_i32_1 = arith.constant 0 : i32
    return %arg0, %c0_i32, %c0_i32_0 : i32, i32, i32
  }
  func.func @transform_1(%arg0: i32) -> (i32, i32) {
    %c0_i32 = arith.constant 0 : i32
    %c0_i32_0 = arith.constant 0 : i32
    %c0_i32_1 = arith.constant 0 : i32
    return %c0_i32, %c0_i32_0 : i32, i32
  }
  func.func @transform_2(%arg0: i32) -> (i32, i32) {
    %c0_i32 = arith.constant 0 : i32
    %c0_i32_0 = arith.constant 0 : i32
    %c0_i32_1 = arith.constant 0 : i32
    return %c0_i32, %c0_i32_0 : i32, i32
  }
  func.func @transform_3(%arg0: i32) -> (i32, i32) {
    %c0_i32 = arith.constant 0 : i32
    %c0_i32_0 = arith.constant 0 : i32
    %c0_i32_1 = arith.constant 0 : i32
    return %c0_i32, %c0_i32_0 : i32, i32
  }
  func.func @transform_4(%arg0: i32) -> (i32, i32) {
    %c0_i32 = arith.constant 0 : i32
    %c0_i32_0 = arith.constant 0 : i32
    %c0_i32_1 = arith.constant 0 : i32
    return %c0_i32, %c0_i32_0 : i32, i32
  }
  func.func @transform_5(%arg0: i32) -> (i32, i32) {
    %c0_i32 = arith.constant 0 : i32
    %c0_i32_0 = arith.constant 0 : i32
    %c0_i32_1 = arith.constant 0 : i32
    return %c0_i32, %c0_i32_0 : i32, i32
  }
  func.func @transform_6(%arg0: i32) -> (i32, i32) {
    %c0_i32 = arith.constant 0 : i32
    %c0_i32_0 = arith.constant 0 : i32
    %c0_i32_1 = arith.constant 0 : i32
    return %c0_i32, %c0_i32_0 : i32, i32
  }
  func.func @transform_7(%arg0: i32) -> (i32, i32) {
    %c0_i32 = arith.constant 0 : i32
    %c0_i32_0 = arith.constant 0 : i32
    %c0_i32_1 = arith.constant 0 : i32
    return %c0_i32, %c0_i32_0 : i32, i32
  }
  func.func @transform_8(%arg0: i32) -> (i32, i32) {
    %c0_i32 = arith.constant 0 : i32
    %c0_i32_0 = arith.constant 0 : i32
    %c0_i32_1 = arith.constant 0 : i32
    return %c0_i32, %c0_i32_0 : i32, i32
  }
  func.func @transform_9(%arg0: i32) -> (i32, i32, i32) {
    %c0_i32 = arith.constant 0 : i32
    %c0_i32_0 = arith.constant 0 : i32
    %c0_i32_1 = arith.constant 0 : i32
    return %arg0, %c0_i32, %c0_i32_0 : i32, i32, i32
  }
}

</mosaic_0001>

<llo_original>
// kernel: forward.1
$region0: #{forward.1}
  #allocation0 [shape = 'u32[]', space=smem, size = 0x4, offset = 0x4, fixed_abs, tag = 'smem constant byte address 0x4 - core index']
  #allocation1 [shape = 'u32[72,128]{1,0:T(1,128)}', space=vmem, size = 0x9000, scoped, tag = 'internal scratch']
  %s0 = inlined_call_operand.hbm [shape: f32[8,16,32], index: 0, kind: input, shape index: {}]
  %s1 = inlined_call_operand.hbm [shape: f32[16,1], index: 1, kind: input, shape index: {}]
  %s2 = inlined_call_operand.hbm [shape: f32[16,16], index: 2, kind: input, shape index: {}]
  %s3 = inlined_call_operand.hbm [shape: f32[32,64], index: 3, kind: input, shape index: {}]
  %s4 = inlined_call_operand.hbm [shape: f32[32,64], index: 4, kind: input, shape index: {}]
  %s5 = inlined_call_operand.vmem [shape: f32[1,64], index: 5, kind: input, shape index: {}]
  %s6 = inlined_call_operand.hbm [shape: f32[64,32], index: 6, kind: input, shape index: {}]
  %s7 = inlined_call_operand.hbm [shape: f32[64,32], index: 7, kind: input, shape index: {}]
  %s8 = inlined_call_operand.vmem [shape: f32[1,32], index: 8, kind: input, shape index: {}]
  %s9 = inlined_call_operand.hbm [shape: f32[8,16,32], index: 9, kind: output, shape index: {}]
  %s10 = sld [smem:[#allocation0]]
  $region97: #{forward.1} parent=0
    _
  %s12 = ssub.s32 1, %s10
  %s13 = scalar_select 0, %s12, %s10
  $region1: #{forward.1} parent=0
    #allocation2 [shape = 'u8[65536]{0}', space=vmem, size = 0x10000, scoped, tag = 'input window, operand 0']
    #allocation3 [shape = 's32[2]{0}', space=sflag, size = 0x8, scoped, tag = 'scoped memory for forward.1']
    #allocation4 [shape = 's32[2]{0}', space=sflag, size = 0x8, scoped, tag = 'scoped memory for forward.1']
    #allocation5 [shape = 'u8[8192]{0}', space=vmem, size = 0x2000, scoped, tag = 'input window, operand 1, single buffered']
    #allocation6 [shape = 's32[1]{0}', space=sflag, size = 0x4, scoped, tag = 'scoped memory for forward.1']
    #allocation7 [shape = 'u8[8192]{0}', space=vmem, size = 0x2000, scoped, tag = 'input window, operand 2, single buffered']
    #allocation8 [shape = 'u8[16384]{0}', space=vmem, size = 0x4000, scoped, tag = 'input window, operand 3, single buffered']
    #allocation9 [shape = 's32[1]{0}', space=sflag, size = 0x4, scoped, tag = 'scoped memory for forward.1']
    #allocation10 [shape = 'u8[16384]{0}', space=vmem, size = 0x4000, scoped, tag = 'input window, operand 4, single buffered']
    #allocation11 [shape = 'u8[32768]{0}', space=vmem, size = 0x8000, scoped, tag = 'input window, operand 6, single buffered']
    #allocation12 [shape = 's32[1]{0}', space=sflag, size = 0x4, scoped, tag = 'scoped memory for forward.1']
    #allocation13 [shape = 'u8[32768]{0}', space=vmem, size = 0x8000, scoped, tag = 'input window, operand 7, single buffered']
    #allocation14 [shape = 'u8[65536]{0}', space=vmem, size = 0x10000, scoped, tag = 'output window, operand 0']
    %14 = vsyncpa [#allocation3], 0
    %s15 = scalar_lea.sflag [#allocation3], 1
    %16 = vsyncpa %s15, 0
    %17 = vsyncpa [#allocation6], 0
    %18 = vsyncpa [#allocation9], 0
    %19 = vsyncpa [#allocation12], 0
    %20 = vsyncpa [#allocation4], 0
    %s21 = scalar_lea.sflag [#allocation4], 1
    %22 = vsyncpa %s21, 0
    loop: start=0, step=1, limit=4
    $region2: #{forward.1} parent=1 // loop_pre_header
      _
    $region3: #{forward.1} parent=1 // loop_header
      %s24 = sphi 0, %s28
      %p25 = scmp.ge.s32.totalorder %s24, 4
      %s34 = sphi 0, %s36
      %s37 = sphi 0, %s34
      %s38 = sphi 0, %s37
      %s54 = sphi 0, %s38
      %s58 = sphi 0, %s58
      %s60 = sphi 0, %s58
      %s61 = sphi 0, %s60
      %s75 = sphi 0, %s61
      %s79 = sphi 0, %s79
      %s81 = sphi 0, %s79
      %s82 = sphi 0, %s81
      %s96 = sphi 0, %s82
      %s100 = sphi 0, %s100
      %s102 = sphi 0, %s100
      %s103 = sphi 0, %s102
      %s117 = sphi 0, %s103
      %s121 = sphi 0, %s121
      %s123 = sphi 0, %s121
      %s124 = sphi 0, %s123
      %s138 = sphi 0, %s124
      %s142 = sphi 0, %s142
      %s144 = sphi 0, %s142
      %s145 = sphi 0, %s144
      %s159 = sphi 0, %s145
      %s163 = sphi 0, %s163
      %s165 = sphi 0, %s163
      %s166 = sphi 0, %s165
      %s180 = sphi 0, %s166
      %s184 = sphi 0, %s184
      %s186 = sphi 0, %s184
      %s187 = sphi 0, %s186
      %s201 = sphi 0, %s187
      %s205 = sphi 0, %s205
      %s207 = sphi 0, %s205
      %s208 = sphi 0, %s207
      %s222 = sphi 0, %s208
      %s228 = sphi 0, %s230
      %s231 = sphi 0, %s228
      %s232 = sphi 0, %s231
      %s248 = sphi 0, %s232
    $region4: #{forward.1} parent=1 // loop_header_branch
      %27 = sbr.rel (%p25) target = $region8
    $region5: #{forward.1} parent=1 // loop_body
      %s29 = ssub.s32 %s24, 1
      %s30 = ssub.s32 %s24, 2
      %s31 = sadd.s32 %s24, 1
      %s32 = ssub.s32 %s24, %s31
      %p33 = scmp.eq.s32.totalorder %s32, 0
      %s35 = sadd.s32 %s34, 1
      %s36 = scalar_select %p33, %s34, %s35
      %p39 = pneg %p33
      %p40 = scmp.eq.s32.totalorder %s24, 1
      %p41 = por %p39, %p40
      %p42 = scmp.ne.s32.totalorder %s34, %s37
      %p43 = scmp.eq.s32.totalorder %s24, 0
      %p44 = por %p42, %p43
      %p45 = scmp.ne.s32.totalorder %s34, %s37
      %p46 = scmp.eq.s32.totalorder %s29, 1
      %p47 = por %p45, %p46
      %p48 = scmp.ne.s32.totalorder %s37, %s38
      %p49 = scmp.eq.s32.totalorder %s29, 0
      %p50 = por %p48, %p49
      %p51 = scmp.ne.s32.totalorder %s37, %s38
      %p52 = scmp.eq.s32.totalorder %s30, 1
      %p53 = por %p51, %p52
      %p55 = scmp.ne.s32.totalorder %s38, %s54
      %p56 = scmp.eq.s32.totalorder %s30, 0
      %p57 = por %p55, %p56
      %s59 = sadd.s32 %s58, 1
      %p62 = scmp.eq.s32.totalorder %s24, 1
      %p63 = scmp.ne.s32.totalorder %s58, %s60
      %p64 = scmp.eq.s32.totalorder %s24, 0
      %p65 = por %p63, %p64
      %p66 = scmp.ne.s32.totalorder %s58, %s60
      %p67 = scmp.eq.s32.totalorder %s29, 1
      %p68 = por %p66, %p67
      %p69 = scmp.ne.s32.totalorder %s60, %s61
      %p70 = scmp.eq.s32.totalorder %s29, 0
      %p71 = por %p69, %p70
      %p72 = scmp.ne.s32.totalorder %s60, %s61
      %p73 = scmp.eq.s32.totalorder %s30, 1
      %p74 = por %p72, %p73
      %p76 = scmp.ne.s32.totalorder %s61, %s75
      %p77 = scmp.eq.s32.totalorder %s30, 0
      %p78 = por %p76, %p77
      %s80 = sadd.s32 %s79, 1
      %p83 = scmp.eq.s32.totalorder %s24, 1
      %p84 = scmp.ne.s32.totalorder %s79, %s81
      %p85 = scmp.eq.s32.totalorder %s24, 0
      %p86 = por %p84, %p85
      %p87 = scmp.ne.s32.totalorder %s79, %s81
      %p88 = scmp.eq.s32.totalorder %s29, 1
      %p89 = por %p87, %p88
      %p90 = scmp.ne.s32.totalorder %s81, %s82
      %p91 = scmp.eq.s32.totalorder %s29, 0
      %p92 = por %p90, %p91
      %p93 = scmp.ne.s32.totalorder %s81, %s82
      %p94 = scmp.eq.s32.totalorder %s30, 1
      %p95 = por %p93, %p94
      %p97 = scmp.ne.s32.totalorder %s82, %s96
      %p98 = scmp.eq.s32.totalorder %s30, 0
      %p99 = por %p97, %p98
      %s101 = sadd.s32 %s100, 1
      %p104 = scmp.eq.s32.totalorder %s24, 1
      %p105 = scmp.ne.s32.totalorder %s100, %s102
      %p106 = scmp.eq.s32.totalorder %s24, 0
      %p107 = por %p105, %p106
      %p108 = scmp.ne.s32.totalorder %s100, %s102
      %p109 = scmp.eq.s32.totalorder %s29, 1
      %p110 = por %p108, %p109
      %p111 = scmp.ne.s32.totalorder %s102, %s103
      %p112 = scmp.eq.s32.totalorder %s29, 0
      %p113 = por %p111, %p112
      %p114 = scmp.ne.s32.totalorder %s102, %s103
      %p115 = scmp.eq.s32.totalorder %s30, 1
      %p116 = por %p114, %p115
      %p118 = scmp.ne.s32.totalorder %s103, %s117
      %p119 = scmp.eq.s32.totalorder %s30, 0
      %p120 = por %p118, %p119
      %s122 = sadd.s32 %s121, 1
      %p125 = scmp.eq.s32.totalorder %s24, 1
      %p126 = scmp.ne.s32.totalorder %s121, %s123
      %p127 = scmp.eq.s32.totalorder %s24, 0
      %p128 = por %p126, %p127
      %p129 = scmp.ne.s32.totalorder %s121, %s123
      %p130 = scmp.eq.s32.totalorder %s29, 1
      %p131 = por %p129, %p130
      %p132 = scmp.ne.s32.totalorder %s123, %s124
      %p133 = scmp.eq.s32.totalorder %s29, 0
      %p134 = por %p132, %p133
      %p135 = scmp.ne.s32.totalorder %s123, %s124
      %p136 = scmp.eq.s32.totalorder %s30, 1
      %p137 = por %p135, %p136
      %p139 = scmp.ne.s32.totalorder %s124, %s138
      %p140 = scmp.eq.s32.totalorder %s30, 0
      %p141 = por %p139, %p140
      %s143 = sadd.s32 %s142, 1
      %p146 = scmp.eq.s32.totalorder %s24, 1
      %p147 = scmp.ne.s32.totalorder %s142, %s144
      %p148 = scmp.eq.s32.totalorder %s24, 0
      %p149 = por %p147, %p148
      %p150 = scmp.ne.s32.totalorder %s142, %s144
      %p151 = scmp.eq.s32.totalorder %s29, 1
      %p152 = por %p150, %p151
      %p153 = scmp.ne.s32.totalorder %s144, %s145
      %p154 = scmp.eq.s32.totalorder %s29, 0
      %p155 = por %p153, %p154
      %p156 = scmp.ne.s32.totalorder %s144, %s145
      %p157 = scmp.eq.s32.totalorder %s30, 1
      %p158 = por %p156, %p157
      %p160 = scmp.ne.s32.totalorder %s145, %s159
      %p161 = scmp.eq.s32.totalorder %s30, 0
      %p162 = por %p160, %p161
      %s164 = sadd.s32 %s163, 1
      %p167 = scmp.eq.s32.totalorder %s24, 1
      %p168 = scmp.ne.s32.totalorder %s163, %s165
      %p169 = scmp.eq.s32.totalorder %s24, 0
      %p170 = por %p168, %p169
      %p171 = scmp.ne.s32.totalorder %s163, %s165
      %p172 = scmp.eq.s32.totalorder %s29, 1
      %p173 = por %p171, %p172
      %p174 = scmp.ne.s32.totalorder %s165, %s166
      %p175 = scmp.eq.s32.totalorder %s29, 0
      %p176 = por %p174, %p175
      %p177 = scmp.ne.s32.totalorder %s165, %s166
      %p178 = scmp.eq.s32.totalorder %s30, 1
      %p179 = por %p177, %p178
      %p181 = scmp.ne.s32.totalorder %s166, %s180
      %p182 = scmp.eq.s32.totalorder %s30, 0
      %p183 = por %p181, %p182
      %s185 = sadd.s32 %s184, 1
      %p188 = scmp.eq.s32.totalorder %s24, 1
      %p189 = scmp.ne.s32.totalorder %s184, %s186
      %p190 = scmp.eq.s32.totalorder %s24, 0
      %p191 = por %p189, %p190
      %p192 = scmp.ne.s32.totalorder %s184, %s186
      %p193 = scmp.eq.s32.totalorder %s29, 1
      %p194 = por %p192, %p193
      %p195 = scmp.ne.s32.totalorder %s186, %s187
      %p196 = scmp.eq.s32.totalorder %s29, 0
      %p197 = por %p195, %p196
      %p198 = scmp.ne.s32.totalorder %s186, %s187
      %p199 = scmp.eq.s32.totalorder %s30, 1
      %p200 = por %p198, %p199
      %p202 = scmp.ne.s32.totalorder %s187, %s201
      %p203 = scmp.eq.s32.totalorder %s30, 0
      %p204 = por %p202, %p203
      %s206 = sadd.s32 %s205, 1
      %p209 = scmp.eq.s32.totalorder %s24, 1
      %p210 = scmp.ne.s32.totalorder %s205, %s207
      %p211 = scmp.eq.s32.totalorder %s24, 0
      %p212 = por %p210, %p211
      %p213 = scmp.ne.s32.totalorder %s205, %s207
      %p214 = scmp.eq.s32.totalorder %s29, 1
      %p215 = por %p213, %p214
      %p216 = scmp.ne.s32.totalorder %s207, %s208
      %p217 = scmp.eq.s32.totalorder %s29, 0
      %p218 = por %p216, %p217
      %p219 = scmp.ne.s32.totalorder %s207, %s208
      %p220 = scmp.eq.s32.totalorder %s30, 1
      %p221 = por %p219, %p220
      %p223 = scmp.ne.s32.totalorder %s208, %s222
      %p224 = scmp.eq.s32.totalorder %s30, 0
      %p225 = por %p223, %p224
      %s226 = ssub.s32 %s24, %s31
      %p227 = scmp.eq.s32.totalorder %s226, 0
      %s229 = sadd.s32 %s228, 1
      %s230 = scalar_select %p227, %s228, %s229
      %p233 = pneg %p227
      %p234 = scmp.eq.s32.totalorder %s24, 1
      %p235 = por %p233, %p234
      %p236 = scmp.ne.s32.totalorder %s228, %s231
      %p237 = scmp.eq.s32.totalorder %s24, 0
      %p238 = por %p236, %p237
      %p239 = scmp.ne.s32.totalorder %s228, %s231
      %p240 = scmp.eq.s32.totalorder %s29, 1
      %p241 = por %p239, %p240
      %p242 = scmp.ne.s32.totalorder %s231, %s232
      %p243 = scmp.eq.s32.totalorder %s29, 0
      %p244 = por %p242, %p243
      %p245 = scmp.ne.s32.totalorder %s231, %s232
      %p246 = scmp.eq.s32.totalorder %s30, 1
      %p247 = por %p245, %p246
      %p249 = scmp.ne.s32.totalorder %s232, %s248
      %p250 = scmp.eq.s32.totalorder %s30, 0
      %p251 = por %p249, %p250
      %p252 = scmp.le.s32.totalorder 1, %s24
      %p253 = scmp.lt.s32.totalorder %s24, 3
      %p254 = pnand %p252, %p253
      %p255 = pneg %p254
      // Predicated region
      $region9: #{forward.1} parent=5 // pred_check
        _
      $region10: #{forward.1} parent=5 // pred_check_branch
        %257 = sbr.rel (%p254) target = $region12
      $region11: #{forward.1} parent=5 // pred_region
        %s258 = ssub.s32 %s24, 1
        // Predicated region
        $region13: #{forward.1} parent=11 // pred_check
          %p259 = pneg %p71
        $region14: #{forward.1} parent=11 // pred_check_branch
          %261 = sbr.rel (%p259) target = $region16
        $region15: #{forward.1} parent=11 // pred_region
          %263 = vsyncadd [#allocation6], 0
          %s264 = sshll.u32 %s1, 4
          %s265 = int_to_ptr.hbm [resolvable:$true] %s264
          %s266 = sshll.u32 [#allocation5], 4
          %s267 = int_to_ptr.vmem [resolvable:$true] %s266
          %272 = dma.hbm_to_vmem [thread:$0]  %s265, 256, %s267, [#allocation6], 128, 128, 8
        $region16: #{forward.1} parent=11 // pred_fallthru
          _
        // Predicated region
        $region17: #{forward.1} parent=11 // pred_check
          %p273 = pneg %p92
        $region18: #{forward.1} parent=11 // pred_check_branch
          %275 = sbr.rel (%p273) target = $region20
        $region19: #{forward.1} parent=11 // pred_region
          %277 = vsyncadd [#allocation6], 0
          %s278 = sshll.u32 %s2, 4
          %s279 = int_to_ptr.hbm [resolvable:$true] %s278
          %s280 = sshll.u32 [#allocation7], 4
          %s281 = int_to_ptr.vmem [resolvable:$true] %s280
          %286 = dma.hbm_to_vmem [thread:$0]  %s279, 256, %s281, [#allocation6], 128, 128, 8
        $region20: #{forward.1} parent=11 // pred_fallthru
          _
        // Predicated region
        $region21: #{forward.1} parent=11 // pred_check
          %p287 = pneg %p113
        $region22: #{forward.1} parent=11 // pred_check_branch
          %289 = sbr.rel (%p287) target = $region24
        $region23: #{forward.1} parent=11 // pred_region
          %291 = vsyncadd [#allocation9], 0
          %s292 = sshll.u32 %s3, 4
          %s293 = int_to_ptr.hbm [resolvable:$true] %s292
          %s294 = sshll.u32 [#allocation8], 4
          %s295 = int_to_ptr.vmem [resolvable:$true] %s294
          %300 = dma.hbm_to_vmem [thread:$0]  %s293, 512, %s295, [#allocation9], 128, 128, 8
        $region24: #{forward.1} parent=11 // pred_fallthru
          _
        // Predicated region
        $region25: #{forward.1} parent=11 // pred_check
          %p301 = pneg %p134
        $region26: #{forward.1} parent=11 // pred_check_branch
          %303 = sbr.rel (%p301) target = $region28
        $region27: #{forward.1} parent=11 // pred_region
          %305 = vsyncadd [#allocation9], 0
          %s306 = sshll.u32 %s4, 4
          %s307 = int_to_ptr.hbm [resolvable:$true] %s306
          %s308 = sshll.u32 [#allocation10], 4
          %s309 = int_to_ptr.vmem [resolvable:$true] %s308
          %314 = dma.hbm_to_vmem [thread:$0]  %s307, 512, %s309, [#allocation9], 128, 128, 8
        $region28: #{forward.1} parent=11 // pred_fallthru
          _
        // Predicated region
        $region29: #{forward.1} parent=11 // pred_check
          %p315 = pneg %p155
        $region30: #{forward.1} parent=11 // pred_check_branch
          %317 = sbr.rel (%p315) target = $region32
        $region31: #{forward.1} parent=11 // pred_region
          _
        $region32: #{forward.1} parent=11 // pred_fallthru
          _
        // Predicated region
        $region33: #{forward.1} parent=11 // pred_check
          %p318 = pneg %p176
        $region34: #{forward.1} parent=11 // pred_check_branch
          %320 = sbr.rel (%p318) target = $region36
        $region35: #{forward.1} parent=11 // pred_region
          %322 = vsyncadd [#allocation12], 0
          %s323 = sshll.u32 %s6, 4
          %s324 = int_to_ptr.hbm [resolvable:$true] %s323
          %s325 = sshll.u32 [#allocation11], 4
          %s326 = int_to_ptr.vmem [resolvable:$true] %s325
          %331 = dma.hbm_to_vmem [thread:$0]  %s324, 1024, %s326, [#allocation12], 128, 128, 8
        $region36: #{forward.1} parent=11 // pred_fallthru
          _
        // Predicated region
        $region37: #{forward.1} parent=11 // pred_check
          %p332 = pneg %p197
        $region38: #{forward.1} parent=11 // pred_check_branch
          %334 = sbr.rel (%p332) target = $region40
        $region39: #{forward.1} parent=11 // pred_region
          %336 = vsyncadd [#allocation12], 0
          %s337 = sshll.u32 %s7, 4
          %s338 = int_to_ptr.hbm [resolvable:$true] %s337
          %s339 = sshll.u32 [#allocation13], 4
          %s340 = int_to_ptr.vmem [resolvable:$true] %s339
          %345 = dma.hbm_to_vmem [thread:$0]  %s338, 1024, %s340, [#allocation12], 128, 128, 8
        $region40: #{forward.1} parent=11 // pred_fallthru
          _
        // Predicated region
        $region41: #{forward.1} parent=11 // pred_check
          %p346 = pneg %p218
        $region42: #{forward.1} parent=11 // pred_check_branch
          %348 = sbr.rel (%p346) target = $region44
        $region43: #{forward.1} parent=11 // pred_region
          _
        $region44: #{forward.1} parent=11 // pred_fallthru
          _
      $region12: #{forward.1} parent=5 // pred_fallthru
        _
      %p349 = scmp.lt.s32.totalorder %s24, 2
      // Predicated region
      $region45: #{forward.1} parent=5 // pred_check
        %p350 = pneg %p349
      $region46: #{forward.1} parent=5 // pred_check_branch
        %352 = sbr.rel (%p350) target = $region48
      $region47: #{forward.1} parent=5 // pred_region
        // Predicated region
        $region49: #{forward.1} parent=47 // pred_check
          %p353 = pneg %p44
        $region50: #{forward.1} parent=47 // pred_check_branch
          %355 = sbr.rel (%p353) target = $region52
        $region51: #{forward.1} parent=47 // pred_region
          %s356 = sand.u32 %s34, 1
          %s357 = scalar_lea.sflag [#allocation3], %s356
          %s358 = sand.u32 %s34, 1
          %s359 = smul.addr %s358, 64
          %s360 = scalar_lea.vmem [#allocation2], %s359
          %s361 = smul.u32 4, %s24
          %363 = vsyncadd %s357, 0
          %s364 = smul.addr %s361, 2
          %s365 = smul.addr %s364, 8
          %s366 = scalar_lea.hbm %s0, %s365
          %s367 = sshll.u32 %s366, 4
          %s368 = int_to_ptr.hbm [resolvable:$true] %s367
          %s369 = sshll.u32 %s360, 4
          %s370 = int_to_ptr.vmem [resolvable:$true] %s369
          %375 = dma.hbm_to_vmem [thread:$0]  %s368, 1024, %s370, %s357, 128, 128, 8
        $region52: #{forward.1} parent=47 // pred_fallthru
          _
      $region48: #{forward.1} parent=5 // pred_fallthru
        _
      %p376 = scmp.le.s32.totalorder 1, %s24
      %p377 = scmp.lt.s32.totalorder %s24, 3
      %p378 = pnand %p376, %p377
      %p379 = pneg %p378
      // Predicated region
      $region53: #{forward.1} parent=5 // pred_check
        _
      $region54: #{forward.1} parent=5 // pred_check_branch
        %381 = sbr.rel (%p378) target = $region56
      $region55: #{forward.1} parent=5 // pred_region
        %s382 = ssub.s32 %s24, 1
        %s383 = sand.u32 %s37, 1
        %s384 = scalar_lea.sflag [#allocation3], %s383
        %s385 = sand.u32 %s37, 1
        %s386 = smul.addr %s385, 64
        %s387 = scalar_lea.vmem [#allocation2], %s386
        // Predicated region
        $region57: #{forward.1} parent=55 // pred_check
          %p388 = pneg %p50
        $region58: #{forward.1} parent=55 // pred_check_branch
          %390 = sbr.rel (%p388) target = $region60
        $region59: #{forward.1} parent=55 // pred_region
          %392 = dma.done %s384, 1024
        $region60: #{forward.1} parent=55 // pred_fallthru
          _
        // Predicated region
        $region61: #{forward.1} parent=55 // pred_check
          %p393 = pneg %p71
        $region62: #{forward.1} parent=55 // pred_check_branch
          %395 = sbr.rel (%p393) target = $region64
        $region63: #{forward.1} parent=55 // pred_region
          %397 = dma.done [#allocation6], 256
        $region64: #{forward.1} parent=55 // pred_fallthru
          _
        // Predicated region
        $region65: #{forward.1} parent=55 // pred_check
          %p398 = pneg %p92
        $region66: #{forward.1} parent=55 // pred_check_branch
          %400 = sbr.rel (%p398) target = $region68
        $region67: #{forward.1} parent=55 // pred_region
          %402 = dma.done [#allocation6], 256
        $region68: #{forward.1} parent=55 // pred_fallthru
          _
        // Predicated region
        $region69: #{forward.1} parent=55 // pred_check
          %p403 = pneg %p113
        $region70: #{forward.1} parent=55 // pred_check_branch
          %405 = sbr.rel (%p403) target = $region72
        $region71: #{forward.1} parent=55 // pred_region
          %407 = dma.done [#allocation9], 512
        $region72: #{forward.1} parent=55 // pred_fallthru
          _
        // Predicated region
        $region73: #{forward.1} parent=55 // pred_check
          %p408 = pneg %p134
        $region74: #{forward.1} parent=55 // pred_check_branch
          %410 = sbr.rel (%p408) target = $region76
        $region75: #{forward.1} parent=55 // pred_region
          %412 = dma.done [#allocation9], 512
        $region76: #{forward.1} parent=55 // pred_fallthru
          _
        // Predicated region
        $region77: #{forward.1} parent=55 // pred_check
          %p413 = pneg %p176
        $region78: #{forward.1} parent=55 // pred_check_branch
          %415 = sbr.rel (%p413) target = $region80
        $region79: #{forward.1} parent=55 // pred_region
          %417 = dma.done [#allocation12], 1024
        $region80: #{forward.1} parent=55 // pred_fallthru
          _
        // Predicated region
        $region81: #{forward.1} parent=55 // pred_check
          %p418 = pneg %p197
        $region82: #{forward.1} parent=55 // pred_check_branch
          %420 = sbr.rel (%p418) target = $region84
        $region83: #{forward.1} parent=55 // pred_region
          %422 = dma.done [#allocation12], 1024
        $region84: #{forward.1} parent=55 // pred_fallthru
          _
        %s423 = sand.u32 %s37, 1
        %s424 = scalar_lea.sflag [#allocation3], %s423
        %s425 = sand.u32 %s37, 1
        %s426 = smul.addr %s425, 64
        %s427 = scalar_lea.vmem [#allocation2], %s426
        %p428 = pneg %p50
        %p429 = pneg %p47
        %p430 = pneg %p71
        %p431 = pneg %p68
        %p432 = pneg %p92
        %p433 = pneg %p89
        %p434 = pneg %p113
        %p435 = pneg %p110
        %p436 = pneg %p134
        %p437 = pneg %p131
        %p438 = pneg %p155
        %p439 = pneg %p152
        %p440 = pneg %p176
        %p441 = pneg %p173
        %p442 = pneg %p197
        %p443 = pneg %p194
        %p444 = pneg %p218
        %p445 = pneg %p215
        %p446 = pneg %p244
        %p447 = pneg %p241
        %s448 = sand.u32 %s231, 1
        %s449 = scalar_lea.sflag [#allocation4], %s448
        %s450 = sand.u32 %s231, 1
        %s451 = smul.addr %s450, 64
        %s452 = scalar_lea.vmem [#allocation14], %s451
        %s453 = smul.u32 4, %s29
        %s454 = smul.u32 4, %s29
        %v455 = vld [vmem:[%s387] sm:$0xff]
        %v456 = vld [vmem:[%s387 + $0x8] sm:$0xff]
        %v457 = vld [vmem:[%s387 + $0x10] sm:$0xff]
        %v458 = vld [vmem:[%s387 + $0x18] sm:$0xff]
        %v459 = vld [vmem:[%s387 + $0x20] sm:$0xff]
        %v460 = vld [vmem:[%s387 + $0x28] sm:$0xff]
        %v461 = vld [vmem:[%s387 + $0x30] sm:$0xff]
        %v462 = vld [vmem:[%s387 + $0x38] sm:$0xff]
        %v463 = vld [vmem:[#allocation5] sm:$0xff]
        %v464 = vld [vmem:[#allocation5 + $0x8] sm:$0xff]
        %v465 = vld [vmem:[#allocation7] sm:$0xff]
        %v466 = vld [vmem:[#allocation7 + $0x8] sm:$0xff]
        %468 = vset.pattern.permute.xlu0 0
        %469 = vperm.xlu0 %468, %v463
        %v470 = vpop.permute.xlu0 %469
        %473 = vset.pattern.permute.xlu0 0
        %474 = vperm.xlu0 %473, %v464
        %v475 = vpop.permute.xlu0 %474
        %v477 = vmul.f32 %v470, %v455
        %v478 = vmul.f32 %v475, %v456
        %v479 = vmul.f32 %v470, %v457
        %v480 = vmul.f32 %v475, %v458
        %v481 = vmul.f32 %v470, %v459
        %v482 = vmul.f32 %v475, %v460
        %v483 = vmul.f32 %v470, %v461
        %v484 = vmul.f32 %v475, %v462
        %vm485 = vcmask 130048
        %v487 = vsel %vm485, %v465, 0
        %v490 = vsel %vm485, %v466, 0
        %492 = vmatpush.msra.mxu0 0.0
        %493 = vmatpush.msra.mxu0 0.0
        %494 = vmatpush.msra.mxu0 0.0
        %495 = vmatpush.msra.mxu0 0.0
        %496 = vmatpush.msra.mxu0 0.0
        %497 = vmatpush.msra.mxu0 0.0
        %498 = vmatpush.msra.mxu0 0.0
        %499 = vmatpush.msra.mxu0 0.0
        %500 = vmatpush.msra.mxu0 0.0
        %501 = vmatpush.msra.mxu0 0.0
        %502 = vmatpush.msra.mxu0 0.0
        %503 = vmatpush.msra.mxu0 0.0
        %504 = vmatpush.msra.mxu0 0.0
        %505 = vmatpush.msra.mxu0 0.0
        %506 = vmatpush.msra.mxu0 %v456
        %507 = vmatpush.msra.mxu0 %v455
        %508 = vmatmul.f32.gmra.mxu0 %v487
        %v509 = vpop.f32.mrf.mxu0
        %v510 = vadd.f32 0.0, %v509
        %511 = vmatmul.f32.gmra.mxu0 %v490
        %v512 = vpop.f32.mrf.mxu0
        %v513 = vadd.f32 0.0, %v512
        %514 = vdwg.mxu0
        %515 = vmatpush.msra.mxu0 0.0
        %516 = vmatpush.msra.mxu0 0.0
        %517 = vmatpush.msra.mxu0 0.0
        %518 = vmatpush.msra.mxu0 0.0
        %519 = vmatpush.msra.mxu0 0.0
        %520 = vmatpush.msra.mxu0 0.0
        %521 = vmatpush.msra.mxu0 0.0
        %522 = vmatpush.msra.mxu0 0.0
        %523 = vmatpush.msra.mxu0 0.0
        %524 = vmatpush.msra.mxu0 0.0
        %525 = vmatpush.msra.mxu0 0.0
        %526 = vmatpush.msra.mxu0 0.0
        %527 = vmatpush.msra.mxu0 0.0
        %528 = vmatpush.msra.mxu0 0.0
        %529 = vmatpush.msra.mxu0 %v458
        %530 = vmatpush.msra.mxu0 %v457
        %531 = vmatmul.f32.gmra.mxu0 %v487
        %v532 = vpop.f32.mrf.mxu0
        %v533 = vadd.f32 0.0, %v532
        %534 = vmatmul.f32.gmra.mxu0 %v490
        %v535 = vpop.f32.mrf.mxu0
        %v536 = vadd.f32 0.0, %v535
        %537 = vdwg.mxu0
        %538 = vmatpush.msra.mxu0 0.0
        %539 = vmatpush.msra.mxu0 0.0
        %540 = vmatpush.msra.mxu0 0.0
        %541 = vmatpush.msra.mxu0 0.0
        %542 = vmatpush.msra.mxu0 0.0
        %543 = vmatpush.msra.mxu0 0.0
        %544 = vmatpush.msra.mxu0 0.0
        %545 = vmatpush.msra.mxu0 0.0
        %546 = vmatpush.msra.mxu0 0.0
        %547 = vmatpush.msra.mxu0 0.0
        %548 = vmatpush.msra.mxu0 0.0
        %549 = vmatpush.msra.mxu0 0.0
        %550 = vmatpush.msra.mxu0 0.0
        %551 = vmatpush.msra.mxu0 0.0
        %552 = vmatpush.msra.mxu0 %v460
        %553 = vmatpush.msra.mxu0 %v459
        %554 = vmatmul.f32.gmra.mxu0 %v487
        %v555 = vpop.f32.mrf.mxu0
        %v556 = vadd.f32 0.0, %v555
        %557 = vmatmul.f32.gmra.mxu0 %v490
        %v558 = vpop.f32.mrf.mxu0
        %v559 = vadd.f32 0.0, %v558
        %560 = vdwg.mxu0
        %561 = vmatpush.msra.mxu0 0.0
        %562 = vmatpush.msra.mxu0 0.0
        %563 = vmatpush.msra.mxu0 0.0
        %564 = vmatpush.msra.mxu0 0.0
        %565 = vmatpush.msra.mxu0 0.0
        %566 = vmatpush.msra.mxu0 0.0
        %567 = vmatpush.msra.mxu0 0.0
        %568 = vmatpush.msra.mxu0 0.0
        %569 = vmatpush.msra.mxu0 0.0
        %570 = vmatpush.msra.mxu0 0.0
        %571 = vmatpush.msra.mxu0 0.0
        %572 = vmatpush.msra.mxu0 0.0
        %573 = vmatpush.msra.mxu0 0.0
        %574 = vmatpush.msra.mxu0 0.0
        %575 = vmatpush.msra.mxu0 %v462
        %576 = vmatpush.msra.mxu0 %v461
        %577 = vmatmul.f32.gmra.mxu0 %v487
        %v578 = vpop.f32.mrf.mxu0
        %v579 = vadd.f32 0.0, %v578
        %580 = vmatmul.f32.gmra.mxu0 %v490
        %v581 = vpop.f32.mrf.mxu0
        %v582 = vadd.f32 0.0, %v581
        %583 = vdwg.mxu0
        %v584 = vld [vmem:[#allocation8] sm:$0xff]
        %v585 = vld [vmem:[#allocation8 + $0x8] sm:$0xff]
        %v586 = vld [vmem:[#allocation8 + $0x10] sm:$0xff]
        %v587 = vld [vmem:[#allocation8 + $0x18] sm:$0xff]
        %v588 = vld [vmem:[#allocation10] sm:$0xff]
        %v589 = vld [vmem:[#allocation10 + $0x8] sm:$0xff]
        %v590 = vld [vmem:[#allocation10 + $0x10] sm:$0xff]
        %v591 = vld [vmem:[#allocation10 + $0x18] sm:$0xff]
        %vm592 = vcmask 261120
        %v594 = vsel %vm592, %v510, 0
        %v597 = vsel %vm592, %v513, 0
        %v600 = vsel %vm592, %v533, 0
        %v603 = vsel %vm592, %v536, 0
        %v606 = vsel %vm592, %v556, 0
        %v609 = vsel %vm592, %v559, 0
        %v612 = vsel %vm592, %v579, 0
        %v615 = vsel %vm592, %v582, 0
        %617 = vmatpush.msra.mxu0 0.0
        %618 = vmatpush.msra.mxu0 0.0
        %619 = vmatpush.msra.mxu0 0.0
        %620 = vmatpush.msra.mxu0 0.0
        %621 = vmatpush.msra.mxu0 0.0
        %622 = vmatpush.msra.mxu0 0.0
        %623 = vmatpush.msra.mxu0 0.0
        %624 = vmatpush.msra.mxu0 0.0
        %625 = vmatpush.msra.mxu0 0.0
        %626 = vmatpush.msra.mxu0 0.0
        %627 = vmatpush.msra.mxu0 0.0
        %628 = vmatpush.msra.mxu0 0.0
        %629 = vmatpush.msra.mxu0 %v591
        %630 = vmatpush.msra.mxu0 %v590
        %631 = vmatpush.msra.mxu0 %v589
        %632 = vmatpush.msra.mxu0 %v588
        %633 = vmatmul.f32.gmra.mxu0 %v594
        %v634 = vpop.f32.mrf.mxu0
        %v635 = vadd.f32 0.0, %v634
        %636 = vmatmul.f32.gmra.mxu0 %v597
        %v637 = vpop.f32.mrf.mxu0
        %v638 = vadd.f32 0.0, %v637
        %639 = vmatmul.f32.gmra.mxu0 %v600
        %v640 = vpop.f32.mrf.mxu0
        %v641 = vadd.f32 0.0, %v640
        %642 = vmatmul.f32.gmra.mxu0 %v603
        %v643 = vpop.f32.mrf.mxu0
        %v644 = vadd.f32 0.0, %v643
        %645 = vmatmul.f32.gmra.mxu0 %v606
        %v646 = vpop.f32.mrf.mxu0
        %v647 = vadd.f32 0.0, %v646
        %648 = vmatmul.f32.gmra.mxu0 %v609
        %v649 = vpop.f32.mrf.mxu0
        %v650 = vadd.f32 0.0, %v649
        %651 = vmatmul.f32.gmra.mxu0 %v612
        %v652 = vpop.f32.mrf.mxu0
        %v653 = vadd.f32 0.0, %v652
        %654 = vmatmul.f32.gmra.mxu0 %v615
        %v655 = vpop.f32.mrf.mxu0
        %v656 = vadd.f32 0.0, %v655
        %657 = vdwg.mxu0
        %v659 = vsel %vm592, %v477, 0
        %v662 = vsel %vm592, %v478, 0
        %v665 = vsel %vm592, %v479, 0
        %v668 = vsel %vm592, %v480, 0
        %v671 = vsel %vm592, %v481, 0
        %v674 = vsel %vm592, %v482, 0
        %v677 = vsel %vm592, %v483, 0
        %v680 = vsel %vm592, %v484, 0
        %682 = vmatpush.msra.mxu0 0.0
        %683 = vmatpush.msra.mxu0 0.0
        %684 = vmatpush.msra.mxu0 0.0
        %685 = vmatpush.msra.mxu0 0.0
        %686 = vmatpush.msra.mxu0 0.0
        %687 = vmatpush.msra.mxu0 0.0
        %688 = vmatpush.msra.mxu0 0.0
        %689 = vmatpush.msra.mxu0 0.0
        %690 = vmatpush.msra.mxu0 0.0
        %691 = vmatpush.msra.mxu0 0.0
        %692 = vmatpush.msra.mxu0 0.0
        %693 = vmatpush.msra.mxu0 0.0
        %694 = vmatpush.msra.mxu0 %v587
        %695 = vmatpush.msra.mxu0 %v586
        %696 = vmatpush.msra.mxu0 %v585
        %697 = vmatpush.msra.mxu0 %v584
        %698 = vmatmul.f32.gmra.mxu0 %v659
        %v699 = vpop.f32.mrf.mxu0
        %v700 = vadd.f32 %v635, %v699
        %701 = vmatmul.f32.gmra.mxu0 %v662
        %v702 = vpop.f32.mrf.mxu0
        %v703 = vadd.f32 %v638, %v702
        %704 = vmatmul.f32.gmra.mxu0 %v665
        %v705 = vpop.f32.mrf.mxu0
        %v706 = vadd.f32 %v641, %v705
        %707 = vmatmul.f32.gmra.mxu0 %v668
        %v708 = vpop.f32.mrf.mxu0
        %v709 = vadd.f32 %v644, %v708
        %710 = vmatmul.f32.gmra.mxu0 %v671
        %v711 = vpop.f32.mrf.mxu0
        %v712 = vadd.f32 %v647, %v711
        %713 = vmatmul.f32.gmra.mxu0 %v674
        %v714 = vpop.f32.mrf.mxu0
        %v715 = vadd.f32 %v650, %v714
        %716 = vmatmul.f32.gmra.mxu0 %v677
        %v717 = vpop.f32.mrf.mxu0
        %v718 = vadd.f32 %v653, %v717
        %719 = vmatmul.f32.gmra.mxu0 %v680
        %v720 = vpop.f32.mrf.mxu0
        %v721 = vadd.f32 %v656, %v720
        %722 = vdwg.mxu0
        %v723 = vld [vmem:[%s5] sm:$0x1]
        %v725 = vperm.slane %v723, 0
        %v727 = vadd.f32 %v700, %v725
        %v728 = vadd.f32 %v703, %v725
        %v729 = vadd.f32 %v706, %v725
        %v730 = vadd.f32 %v709, %v725
        %v731 = vadd.f32 %v712, %v725
        %v732 = vadd.f32 %v715, %v725
        %v733 = vadd.f32 %v718, %v725
        %v734 = vadd.f32 %v721, %v725
        %v735 = vmax.f32 %v727, 0.0
        %v736 = vmax.f32 %v728, 0.0
        %v737 = vmax.f32 %v729, 0.0
        %v738 = vmax.f32 %v730, 0.0
        %v739 = vmax.f32 %v731, 0.0
        %v740 = vmax.f32 %v732, 0.0
        %v741 = vmax.f32 %v733, 0.0
        %v742 = vmax.f32 %v734, 0.0
        %v743 = vmul.f32 %v470, %v735
        %v744 = vmul.f32 %v475, %v736
        %v745 = vmul.f32 %v470, %v737
        %v746 = vmul.f32 %v475, %v738
        %v747 = vmul.f32 %v470, %v739
        %v748 = vmul.f32 %v475, %v740
        %v749 = vmul.f32 %v470, %v741
        %v750 = vmul.f32 %v475, %v742
        %751 = vmatpush.msra.mxu0 0.0
        %752 = vmatpush.msra.mxu0 0.0
        %753 = vmatpush.msra.mxu0 0.0
        %754 = vmatpush.msra.mxu0 0.0
        %755 = vmatpush.msra.mxu0 0.0
        %756 = vmatpush.msra.mxu0 0.0
        %757 = vmatpush.msra.mxu0 0.0
        %758 = vmatpush.msra.mxu0 0.0
        %759 = vmatpush.msra.mxu0 0.0
        %760 = vmatpush.msra.mxu0 0.0
        %761 = vmatpush.msra.mxu0 0.0
        %762 = vmatpush.msra.mxu0 0.0
        %763 = vmatpush.msra.mxu0 0.0
        %764 = vmatpush.msra.mxu0 0.0
        %765 = vmatpush.msra.mxu0 %v736
        %766 = vmatpush.msra.mxu0 %v735
        %767 = vmatmul.f32.gmra.mxu0 %v487
        %v768 = vpop.f32.mrf.mxu0
        %v769 = vadd.f32 0.0, %v768
        %770 = vmatmul.f32.gmra.mxu0 %v490
        %v771 = vpop.f32.mrf.mxu0
        %v772 = vadd.f32 0.0, %v771
        %773 = vdwg.mxu0
        %774 = vmatpush.msra.mxu0 0.0
        %775 = vmatpush.msra.mxu0 0.0
        %776 = vmatpush.msra.mxu0 0.0
        %777 = vmatpush.msra.mxu0 0.0
        %778 = vmatpush.msra.mxu0 0.0
        %779 = vmatpush.msra.mxu0 0.0
        %780 = vmatpush.msra.mxu0 0.0
        %781 = vmatpush.msra.mxu0 0.0
        %782 = vmatpush.msra.mxu0 0.0
        %783 = vmatpush.msra.mxu0 0.0
        %784 = vmatpush.msra.mxu0 0.0
        %785 = vmatpush.msra.mxu0 0.0
        %786 = vmatpush.msra.mxu0 0.0
        %787 = vmatpush.msra.mxu0 0.0
        %788 = vmatpush.msra.mxu0 %v738
        %789 = vmatpush.msra.mxu0 %v737
        %790 = vmatmul.f32.gmra.mxu0 %v487
        %v791 = vpop.f32.mrf.mxu0
        %v792 = vadd.f32 0.0, %v791
        %793 = vmatmul.f32.gmra.mxu0 %v490
        %v794 = vpop.f32.mrf.mxu0
        %v795 = vadd.f32 0.0, %v794
        %796 = vdwg.mxu0
        %797 = vmatpush.msra.mxu0 0.0
        %798 = vmatpush.msra.mxu0 0.0
        %799 = vmatpush.msra.mxu0 0.0
        %800 = vmatpush.msra.mxu0 0.0
        %801 = vmatpush.msra.mxu0 0.0
        %802 = vmatpush.msra.mxu0 0.0
        %803 = vmatpush.msra.mxu0 0.0
        %804 = vmatpush.msra.mxu0 0.0
        %805 = vmatpush.msra.mxu0 0.0
        %806 = vmatpush.msra.mxu0 0.0
        %807 = vmatpush.msra.mxu0 0.0
        %808 = vmatpush.msra.mxu0 0.0
        %809 = vmatpush.msra.mxu0 0.0
        %810 = vmatpush.msra.mxu0 0.0
        %811 = vmatpush.msra.mxu0 %v740
        %812 = vmatpush.msra.mxu0 %v739
        %813 = vmatmul.f32.gmra.mxu0 %v487
        %v814 = vpop.f32.mrf.mxu0
        %v815 = vadd.f32 0.0, %v814
        %816 = vmatmul.f32.gmra.mxu0 %v490
        %v817 = vpop.f32.mrf.mxu0
        %v818 = vadd.f32 0.0, %v817
        %819 = vdwg.mxu0
        %820 = vmatpush.msra.mxu0 0.0
        %821 = vmatpush.msra.mxu0 0.0
        %822 = vmatpush.msra.mxu0 0.0
        %823 = vmatpush.msra.mxu0 0.0
        %824 = vmatpush.msra.mxu0 0.0
        %825 = vmatpush.msra.mxu0 0.0
        %826 = vmatpush.msra.mxu0 0.0
        %827 = vmatpush.msra.mxu0 0.0
        %828 = vmatpush.msra.mxu0 0.0
        %829 = vmatpush.msra.mxu0 0.0
        %830 = vmatpush.msra.mxu0 0.0
        %831 = vmatpush.msra.mxu0 0.0
        %832 = vmatpush.msra.mxu0 0.0
        %833 = vmatpush.msra.mxu0 0.0
        %834 = vmatpush.msra.mxu0 %v742
        %835 = vmatpush.msra.mxu0 %v741
        %836 = vmatmul.f32.gmra.mxu0 %v487
        %v837 = vpop.f32.mrf.mxu0
        %v838 = vadd.f32 0.0, %v837
        %839 = vmatmul.f32.gmra.mxu0 %v490
        %v840 = vpop.f32.mrf.mxu0
        %v841 = vadd.f32 0.0, %v840
        %842 = vdwg.mxu0
        %v843 = vld [vmem:[#allocation11] sm:$0xff]
        %v844 = vld [vmem:[#allocation11 + $0x8] sm:$0xff]
        %v845 = vld [vmem:[#allocation11 + $0x10] sm:$0xff]
        %v846 = vld [vmem:[#allocation11 + $0x18] sm:$0xff]
        %v847 = vld [vmem:[#allocation11 + $0x20] sm:$0xff]
        %v848 = vld [vmem:[#allocation11 + $0x28] sm:$0xff]
        %v849 = vld [vmem:[#allocation11 + $0x30] sm:$0xff]
        %v850 = vld [vmem:[#allocation11 + $0x38] sm:$0xff]
        %v851 = vld [vmem:[#allocation13] sm:$0xff]
        %v852 = vld [vmem:[#allocation13 + $0x8] sm:$0xff]
        %v853 = vld [vmem:[#allocation13 + $0x10] sm:$0xff]
        %v854 = vld [vmem:[#allocation13 + $0x18] sm:$0xff]
        %v855 = vld [vmem:[#allocation13 + $0x20] sm:$0xff]
        %v856 = vld [vmem:[#allocation13 + $0x28] sm:$0xff]
        %v857 = vld [vmem:[#allocation13 + $0x30] sm:$0xff]
        %v858 = vld [vmem:[#allocation13 + $0x38] sm:$0xff]
        %vm859 = vcmask 523264
        %v861 = vsel %vm859, %v769, 0
        %v864 = vsel %vm859, %v772, 0
        %v867 = vsel %vm859, %v792, 0
        %v870 = vsel %vm859, %v795, 0
        %v873 = vsel %vm859, %v815, 0
        %v876 = vsel %vm859, %v818, 0
        %v879 = vsel %vm859, %v838, 0
        %v882 = vsel %vm859, %v841, 0
        %884 = vmatpush.msra.mxu0 0.0
        %885 = vmatpush.msra.mxu0 0.0
        %886 = vmatpush.msra.mxu0 0.0
        %887 = vmatpush.msra.mxu0 0.0
        %888 = vmatpush.msra.mxu0 0.0
        %889 = vmatpush.msra.mxu0 0.0
        %890 = vmatpush.msra.mxu0 0.0
        %891 = vmatpush.msra.mxu0 0.0
        %892 = vmatpush.msra.mxu0 %v858
        %893 = vmatpush.msra.mxu0 %v857
        %894 = vmatpush.msra.mxu0 %v856
        %895 = vmatpush.msra.mxu0 %v855
        %896 = vmatpush.msra.mxu0 %v854
        %897 = vmatpush.msra.mxu0 %v853
        %898 = vmatpush.msra.mxu0 %v852
        %899 = vmatpush.msra.mxu0 %v851
        %900 = vmatmul.f32.gmra.mxu0 %v861
        %v901 = vpop.f32.mrf.mxu0
        %v902 = vadd.f32 0.0, %v901
        %903 = vmatmul.f32.gmra.mxu0 %v864
        %v904 = vpop.f32.mrf.mxu0
        %v905 = vadd.f32 0.0, %v904
        %906 = vmatmul.f32.gmra.mxu0 %v867
        %v907 = vpop.f32.mrf.mxu0
        %v908 = vadd.f32 0.0, %v907
        %909 = vmatmul.f32.gmra.mxu0 %v870
        %v910 = vpop.f32.mrf.mxu0
        %v911 = vadd.f32 0.0, %v910
        %912 = vmatmul.f32.gmra.mxu0 %v873
        %v913 = vpop.f32.mrf.mxu0
        %v914 = vadd.f32 0.0, %v913
        %915 = vmatmul.f32.gmra.mxu0 %v876
        %v916 = vpop.f32.mrf.mxu0
        %v917 = vadd.f32 0.0, %v916
        %918 = vmatmul.f32.gmra.mxu0 %v879
        %v919 = vpop.f32.mrf.mxu0
        %v920 = vadd.f32 0.0, %v919
        %921 = vmatmul.f32.gmra.mxu0 %v882
        %v922 = vpop.f32.mrf.mxu0
        %v923 = vadd.f32 0.0, %v922
        %924 = vdwg.mxu0
        %v926 = vsel %vm859, %v743, 0
        %v929 = vsel %vm859, %v744, 0
        %v932 = vsel %vm859, %v745, 0
        %v935 = vsel %vm859, %v746, 0
        %v938 = vsel %vm859, %v747, 0
        %v941 = vsel %vm859, %v748, 0
        %v944 = vsel %vm859, %v749, 0
        %v947 = vsel %vm859, %v750, 0
        %949 = vmatpush.msra.mxu0 0.0
        %950 = vmatpush.msra.mxu0 0.0
        %951 = vmatpush.msra.mxu0 0.0
        %952 = vmatpush.msra.mxu0 0.0
        %953 = vmatpush.msra.mxu0 0.0
        %954 = vmatpush.msra.mxu0 0.0
        %955 = vmatpush.msra.mxu0 0.0
        %956 = vmatpush.msra.mxu0 0.0
        %957 = vmatpush.msra.mxu0 %v850
        %958 = vmatpush.msra.mxu0 %v849
        %959 = vmatpush.msra.mxu0 %v848
        %960 = vmatpush.msra.mxu0 %v847
        %961 = vmatpush.msra.mxu0 %v846
        %962 = vmatpush.msra.mxu0 %v845
        %963 = vmatpush.msra.mxu0 %v844
        %964 = vmatpush.msra.mxu0 %v843
        %965 = vmatmul.f32.gmra.mxu0 %v926
        %v966 = vpop.f32.mrf.mxu0
        %v967 = vadd.f32 %v902, %v966
        %968 = vmatmul.f32.gmra.mxu0 %v929
        %v969 = vpop.f32.mrf.mxu0
        %v970 = vadd.f32 %v905, %v969
        %971 = vmatmul.f32.gmra.mxu0 %v932
        %v972 = vpop.f32.mrf.mxu0
        %v973 = vadd.f32 %v908, %v972
        %974 = vmatmul.f32.gmra.mxu0 %v935
        %v975 = vpop.f32.mrf.mxu0
        %v976 = vadd.f32 %v911, %v975
        %977 = vmatmul.f32.gmra.mxu0 %v938
        %v978 = vpop.f32.mrf.mxu0
        %v979 = vadd.f32 %v914, %v978
        %980 = vmatmul.f32.gmra.mxu0 %v941
        %v981 = vpop.f32.mrf.mxu0
        %v982 = vadd.f32 %v917, %v981
        %983 = vmatmul.f32.gmra.mxu0 %v944
        %v984 = vpop.f32.mrf.mxu0
        %v985 = vadd.f32 %v920, %v984
        %986 = vmatmul.f32.gmra.mxu0 %v947
        %v987 = vpop.f32.mrf.mxu0
        %v988 = vadd.f32 %v923, %v987
        %989 = vdwg.mxu0
        %v990 = vld [vmem:[%s8] sm:$0x1]
        %v992 = vperm.slane %v990, 0
        %v994 = vadd.f32 %v967, %v992
        %v995 = vadd.f32 %v970, %v992
        %v996 = vadd.f32 %v973, %v992
        %v997 = vadd.f32 %v976, %v992
        %v998 = vadd.f32 %v979, %v992
        %v999 = vadd.f32 %v982, %v992
        %v1000 = vadd.f32 %v985, %v992
        %v1001 = vadd.f32 %v988, %v992
        %v1002 = vmax.f32 %v994, 0.0
        %v1003 = vmax.f32 %v995, 0.0
        %v1004 = vmax.f32 %v996, 0.0
        %v1005 = vmax.f32 %v997, 0.0
        %v1006 = vmax.f32 %v998, 0.0
        %v1007 = vmax.f32 %v999, 0.0
        %v1008 = vmax.f32 %v1000, 0.0
        %v1009 = vmax.f32 %v1001, 0.0
        %v1010 = vadd.f32 %v455, %v1002
        %v1011 = vadd.f32 %v456, %v1003
        %v1012 = vadd.f32 %v457, %v1004
        %v1013 = vadd.f32 %v458, %v1005
        %v1014 = vadd.f32 %v459, %v1006
        %v1015 = vadd.f32 %v460, %v1007
        %v1016 = vadd.f32 %v461, %v1008
        %v1017 = vadd.f32 %v462, %v1009
        %1018 = vst.msk [vmem:[%s452] sm:$0xff] %vm592, %v1010
        %1019 = vst.msk [vmem:[%s452 + $0x8] sm:$0xff] %vm592, %v1011
        %1020 = vst.msk [vmem:[%s452 + $0x10] sm:$0xff] %vm592, %v1012
        %1021 = vst.msk [vmem:[%s452 + $0x18] sm:$0xff] %vm592, %v1013
        %1022 = vst.msk [vmem:[%s452 + $0x20] sm:$0xff] %vm592, %v1014
        %1023 = vst.msk [vmem:[%s452 + $0x28] sm:$0xff] %vm592, %v1015
        %1024 = vst.msk [vmem:[%s452 + $0x30] sm:$0xff] %vm592, %v1016
        %1025 = vst.msk [vmem:[%s452 + $0x38] sm:$0xff] %vm592, %v1017
        %s1026 = sand.u32 %s231, 1
        %s1027 = scalar_lea.sflag [#allocation4], %s1026
        %s1028 = sand.u32 %s231, 1
        %s1029 = smul.addr %s1028, 64
        %s1030 = scalar_lea.vmem [#allocation14], %s1029
        // Predicated region
        $region85: #{forward.1} parent=55 // pred_check
          %p1031 = pneg %p241
        $region86: #{forward.1} parent=55 // pred_check_branch
          %1033 = sbr.rel (%p1031) target = $region88
        $region87: #{forward.1} parent=55 // pred_region
          %s1034 = smul.u32 4, %s29
          %1036 = vsyncadd %s1027, 0
          %s1037 = smul.addr %s1034, 2
          %s1038 = smul.addr %s1037, 8
          %s1039 = scalar_lea.hbm %s9, %s1038
          %s1040 = sshll.u32 %s1030, 4
          %s1041 = int_to_ptr.vmem [resolvable:$true] %s1040
          %s1042 = sshll.u32 %s1039, 4
          %s1043 = int_to_ptr.hbm [resolvable:$true] %s1042
          %1048 = dma.vmem_to_hbm [thread:$0]  %s1041, 1024, %s1043, %s1027, 128, 128, 8
        $region88: #{forward.1} parent=55 // pred_fallthru
          _
      $region56: #{forward.1} parent=5 // pred_fallthru
        _
      %p1049 = scmp.le.s32.totalorder 2, %s24
      // Predicated region
      $region89: #{forward.1} parent=5 // pred_check
        %p1050 = pneg %p1049
      $region90: #{forward.1} parent=5 // pred_check_branch
        %1052 = sbr.rel (%p1050) target = $region92
      $region91: #{forward.1} parent=5 // pred_region
        %s1053 = ssub.s32 %s24, 2
        // Predicated region
        $region93: #{forward.1} parent=91 // pred_check
          %p1054 = pneg %p247
        $region94: #{forward.1} parent=91 // pred_check_branch
          %1056 = sbr.rel (%p1054) target = $region96
        $region95: #{forward.1} parent=91 // pred_region
          %s1057 = sand.u32 %s232, 1
          %s1058 = scalar_lea.sflag [#allocation4], %s1057
          %s1059 = sand.u32 %s232, 1
          %s1060 = smul.addr %s1059, 64
          %s1061 = scalar_lea.vmem [#allocation14], %s1060
          %1063 = dma.done %s1058, 1024
        $region96: #{forward.1} parent=91 // pred_fallthru
          _
      $region92: #{forward.1} parent=5 // pred_fallthru
        _
    $region6: #{forward.1} parent=1 // loop_footer
      %s28 = sadd.s32 1, %s24
    $region7: #{forward.1} parent=1 // loop_footer_branch
      %23 = sbr.rel target = $region3
    $region8: #{forward.1} parent=1 // loop_exit
      _
    %1064 = vsyncpa [#allocation3], 1
    %s1065 = scalar_lea.sflag [#allocation3], 1
    %1066 = vsyncpa %s1065, 1
    %1067 = vsyncpa [#allocation6], 1
    %1068 = vsyncpa [#allocation9], 1
    %1069 = vsyncpa [#allocation12], 1
    %1070 = vsyncpa [#allocation4], 1
    %s1071 = scalar_lea.sflag [#allocation4], 1
    %1072 = vsyncpa %s1071, 1

</llo_original>
